<compile_context>
chip_gen: v5e
topology: v5e:2x2
jax: 0.10.0
libtpu: 0.0.40
codegen_flags: <defaults>
</compile_context>

<pallas_src>
import functools

import jax
import jax.numpy as jnp
from jax.experimental import pallas as pl
from jax.experimental.pallas import tpu as pltpu


def _round_up(a, b):
    return ((a + b - 1) // b) * b


def _lane_target():
    """256-lane packing on v6e/v7x (2x256x256 MXU); 128 on v5e / unknown."""
    try:
        kind = jax.devices()[0].device_kind.lower()
    except Exception:
        return 128
    if any(t in kind for t in ("v6", "v7", "tpu7", "7x")):
        return 256
    return 128


def _vmem_limit(tile_bytes):
    """Explicit scoped-VMEM request sized from the actual tile footprint."""
    need = 2 * tile_bytes + (8 << 20)          # double-buffering + headroom
    return int(min(max(need, 16 << 20), 64 << 20))


# ---------------------------------------------------------------------------
# Kernels
# ---------------------------------------------------------------------------
def _mask_for_tile(shape, row_base, pack, cout, m_valid):
    """True where a packed element maps to a real (unpadded) input row."""
    row = jax.lax.broadcasted_iota(jnp.int32, shape, 0)
    lane = jax.lax.broadcasted_iota(jnp.int32, shape, 1)
    orig = (row_base + row) * pack + lane // cout
    return orig < m_valid


def _stats_kernel(x_ref, w_ref, b_ref, s_ref, ss_ref, *, tm, pack, cout,
                  m_valid, need_mask):
    """Per M-tile: h = relu(x @ w + b); emit per-(pack-slot, channel) sums."""
    h = jnp.dot(x_ref[...], w_ref[...], preferred_element_type=jnp.float32)
    h = jnp.maximum(h + b_ref[...], 0.0)
    if need_mask:
        mask = _mask_for_tile(h.shape, pl.program_id(0) * tm, pack, cout, m_valid)
        h = jnp.where(mask, h, 0.0)
    s = jnp.sum(h, axis=0, keepdims=True)        # (1, cout_p)
    ss = jnp.sum(h * h, axis=0, keepdims=True)   # (1, cout_p)
    # Broadcast to 8 sublanes so each tile writes an aligned (8, cout_p) slab
    # (unmasked stores); the 8x overcount is divided out between the passes.
    s_ref[...] = jnp.broadcast_to(s, s_ref.shape)
    ss_ref[...] = jnp.broadcast_to(ss, ss_ref.shape)


def _apply_kernel(x_ref, w_ref, b_ref, sc_ref, sh_ref, o_ref):
    """Per M-tile: recompute relu(x @ w + b), apply the folded BN affine."""
    h = jnp.dot(x_ref[...], w_ref[...], preferred_element_type=jnp.float32)
    h = jnp.maximum(h + b_ref[...], 0.0)
    o_ref[...] = h * sc_ref[...] + sh_ref[...]


def _fused_kernel(x_ref, w_ref, b_ref, g_ref, bt_ref, *rest, pack, cout,
                  m_valid, eps, need_mask):
    """Single-call path: whole problem in VMEM; two-pass (centered) variance."""
    o_ref = rest[-1]
    r_ref = rest[0] if pack > 1 else None

    h = jnp.dot(x_ref[...], w_ref[...], preferred_element_type=jnp.float32)
    h = jnp.maximum(h + b_ref[...], 0.0)
    mask = None
    if need_mask:
        mask = _mask_for_tile(h.shape, 0, pack, cout, m_valid)
        hm = jnp.where(mask, h, 0.0)
    else:
        hm = h
    inv_n = 1.0 / m_valid
    s = jnp.sum(hm, axis=0, keepdims=True)                   # (1, cout_p)
    if pack > 1:  # fold the `pack` lane replicas of each channel together
        s = jnp.dot(s, r_ref[...], preferred_element_type=jnp.float32)
    mean = s * inv_n
    d = h - mean
    if need_mask:
        d = jnp.where(mask, d, 0.0)
    ss = jnp.sum(d * d, axis=0, keepdims=True)
    if pack > 1:
        ss = jnp.dot(ss, r_ref[...], preferred_element_type=jnp.float32)
    var = ss * inv_n
    inv_std = jax.lax.rsqrt(var + eps)
    scale = g_ref[...] * inv_std
    shift = bt_ref[...] - mean * scale
    o_ref[...] = h * scale + shift


# ---------------------------------------------------------------------------
# Wrapper
# ---------------------------------------------------------------------------
def fcn_forward(x, w, b, gamma, beta, eps=1e-5):
    """x: (B, H, W, cin) f32 -> (B, H, W, cout) f32  (Linear -> ReLU -> BN)."""
    B, H, W, cin = x.shape
    cout = w.shape[1]
    M = B * H * W
    f32 = jnp.float32

    # Lane-dense packing: fold `pack` consecutive rows into the lane axis via a
    # block-diagonal weight so every output store is a full-width vst.
    lane_target = _lane_target()
    pack = 1
    for lanes in (lane_target, 128):
        if cout <= lanes and lanes % cout == 0 and cin * (lanes // cout) <= 1024:
            pack = lanes // cout
            break
    # TODO(synk): when 128 % cout != 0, pad cout up to a multiple of 128 so the
    # output stays lane-dense instead of falling back to masked partial stores.

    cin_p, cout_p = cin * pack, cout * pack
    mp_raw = -(-M // pack)                      # packed rows before padding

    # Parameter preprocessing (hoist out of the step in real use; here the
    # whole forward is jitted so these fold into the compiled graph once).
    w_p = jnp.kron(jnp.eye(pack, dtype=f32), w.astype(f32))   # (cin_p, cout_p)
    b_p = jnp.tile(b.astype(f32), pack).reshape(1, cout_p)
    g_p = jnp.tile(gamma.astype(f32), pack).reshape(1, cout_p)
    bt_p = jnp.tile(beta.astype(f32), pack).reshape(1, cout_p)

    def pack_x(mp):
        rows = mp * pack
        x2 = x.reshape(M, cin).astype(f32)
        if rows > M:
            x2 = jnp.pad(x2, ((0, rows - M), (0, 0)))
        return x2.reshape(mp, cin_p)

    mp_small = _round_up(max(mp_raw, 1), 8)
    fused_bytes = 4 * mp_small * (cin_p + 2 * cout_p)

    if fused_bytes <= (4 << 20):
        # ---------------- fused single-call fast path (small problems) ------
        mp = mp_small
        need_mask = mp * pack != M
        x_p = pack_x(mp)
        inputs = [x_p, w_p, b_p, g_p, bt_p]
        if pack > 1:
            ch = jnp.arange(cout_p) % cout
            inputs.append((ch[:, None] == ch[None, :]).astype(f32))  # replica-sum
        tile_bytes = 4 * (mp * cin_p + cin_p * cout_p + 3 * cout_p
                          + (cout_p * cout_p if pack > 1 else 0)
                          + 2 * mp * cout_p)
        y_p = pl.pallas_call(
            functools.partial(_fused_kernel, pack=pack, cout=cout, m_valid=M,
                              eps=eps, need_mask=need_mask),
            out_shape=jax.ShapeDtypeStruct((mp, cout_p), f32),
            compiler_params=pltpu.CompilerParams(
                vmem_limit_bytes=_vmem_limit(tile_bytes)),
            cost_estimate=pl.CostEstimate(
                flops=4 * mp * cin_p * cout_p,
                transcendentals=cout_p,
                bytes_accessed=4 * (mp * cin_p + mp * cout_p + cin_p * cout_p)),
        )(*inputs)
    else:
        # ---------------- two-pass streaming path (large problems) ----------
        tm2 = max(8, min(1024, _round_up(-(-mp_raw // 2), 8)))  # >=2 tiles (v7x)
        mp = _round_up(mp_raw, tm2)
        mt2 = mp // tm2
        fac = 1
        for f in (8, 4, 2):          # pass-1 only streams x and writes (8,C):
            if mt2 % f == 0 and mt2 // f >= 2:   # it can use bigger tiles.
                fac = f
                break
        tm1, mt1 = tm2 * fac, mt2 // fac
        need_mask = mp * pack != M
        x_p = pack_x(mp)

        # Pass 1: per-tile partial sums / sums of squares (distinct output
        # blocks -> the grid axis stays "parallel"; no h round-trip to HBM).
        p1_tile_bytes = 4 * (tm1 * cin_p + cin_p * cout_p + cout_p + 16 * cout_p)
        s_part, ss_part = pl.pallas_call(
            functools.partial(_stats_kernel, tm=tm1, pack=pack, cout=cout,
                              m_valid=M, need_mask=need_mask),
            out_shape=(jax.ShapeDtypeStruct((mt1 * 8, cout_p), f32),
                       jax.ShapeDtypeStruct((mt1 * 8, cout_p), f32)),
            grid=(mt1,),
            in_specs=[
                pl.BlockSpec((tm1, cin_p), lambda i: (i, 0)),
                pl.BlockSpec((cin_p, cout_p), lambda i: (0, 0)),
                pl.BlockSpec((1, cout_p), lambda i: (0, 0)),
            ],
            out_specs=(pl.BlockSpec((8, cout_p), lambda i: (i, 0)),
                       pl.BlockSpec((8, cout_p), lambda i: (i, 0))),
            compiler_params=pltpu.CompilerParams(
                dimension_semantics=("parallel",),
                vmem_limit_bytes=_vmem_limit(p1_tile_bytes)),
            cost_estimate=pl.CostEstimate(
                flops=2 * mp * cin_p * cout_p + 4 * mp * cout_p,
                transcendentals=0,
                bytes_accessed=4 * (mp * cin_p + cin_p * cout_p
                                    + 2 * mt1 * 8 * cout_p)),
        )(x_p, w_p, b_p)

        # Tiny XLA reduction between passes: fold tiles, the 8x sublane
        # broadcast and the pack replicas into one per-channel scale/shift.
        # (BN fold hoisted out of pass 2 -> flat per-step cost, no (mt*8, C)
        # blocks resident in VMEM.)
        s_c = s_part.sum(axis=0).reshape(pack, cout).sum(axis=0) / 8.0
        ss_c = ss_part.sum(axis=0).reshape(pack, cout).sum(axis=0) / 8.0
        mean = s_c / M
        # TODO(synk): one-pass E[h^2]-E[h]^2 (clamped) can lose precision for
        # very large M; switch to a centered second stats pass if that bites.
        var = jnp.maximum(ss_c / M - mean * mean, 0.0)
        inv_std = jax.lax.rsqrt(var + eps)
        scale = gamma.astype(f32) * inv_std
        shift = beta.astype(f32) - mean * scale
        sc_p = jnp.tile(scale, pack).reshape(1, cout_p)
        sh_p = jnp.tile(shift, pack).reshape(1, cout_p)

        # Pass 2: recompute relu(x @ w + b), apply the folded affine,
        # write lane-dense y.  ~2.5x less HBM traffic than storing h.
        p2_tile_bytes = 4 * (tm2 * cin_p + cin_p * cout_p + 3 * cout_p
                             + tm2 * cout_p)
        y_p = pl.pallas_call(
            _apply_kernel,
            out_shape=jax.ShapeDtypeStruct((mp, cout_p), f32),
            grid=(mt2,),
            in_specs=[
                pl.BlockSpec((tm2, cin_p), lambda i: (i, 0)),
                pl.BlockSpec((cin_p, cout_p), lambda i: (0, 0)),
                pl.BlockSpec((1, cout_p), lambda i: (0, 0)),
                pl.BlockSpec((1, cout_p), lambda i: (0, 0)),
                pl.BlockSpec((1, cout_p), lambda i: (0, 0)),
            ],
            out_specs=pl.BlockSpec((tm2, cout_p), lambda i: (i, 0)),
            compiler_params=pltpu.CompilerParams(
                dimension_semantics=("parallel",),
                vmem_limit_bytes=_vmem_limit(p2_tile_bytes)),
            cost_estimate=pl.CostEstimate(
                flops=2 * mp * cin_p * cout_p + 3 * mp * cout_p,
                transcendentals=0,
                bytes_accessed=4 * (mp * cin_p + cin_p * cout_p + mp * cout_p)),
        )(x_p, w_p, b_p, sc_p, sh_p)

    # Unpack lanes back to channels and drop padded rows (metadata reshapes).
    return y_p.reshape(mp * pack, cout)[:M].reshape(B, H, W, cout)


if __name__ == "__main__":
    key = jax.random.PRNGKey(0)
    kx, kw, kb, kx2 = jax.random.split(key, 4)

    def reference(x, w, b, gamma, beta, eps=1e-5):
        h = jnp.maximum(x.reshape(-1, x.shape[-1]) @ w + b, 0.0)
        mu = h.mean(axis=0)
        va = h.var(axis=0)              # biased, as PyTorch training-mode BN
        y = (h - mu) * jax.lax.rsqrt(va + eps) * gamma + beta
        return y.reshape(*x.shape[:-1], w.shape[1])

    fcn = jax.jit(fcn_forward)

    # Shapes per nn.Linear(cin, cout) + nn.BatchNorm2d(cout); Linear weight is
    # stored as (cin, cout) so x @ w == x @ W_pytorch.T.
    B, H, W, cin, cout = 2, 16, 16, 4, 32
    bound = 1.0 / (cin ** 0.5)
    x = jax.random.normal(kx, (B, H, W, cin), dtype=jnp.float32)
    w = jax.random.uniform(kw, (cin, cout), jnp.float32, -bound, bound)
    b = jax.random.uniform(kb, (cout,), jnp.float32, -bound, bound)
    gamma = jnp.ones((cout,), jnp.float32)
    beta = jnp.zeros((cout,), jnp.float32)

    # --- small demo shape: hits the fused single-call path ------------------
    y = jax.block_until_ready(fcn(x, w, b, gamma, beta))
    ref = reference(x, w, b, gamma, beta)
    assert y.shape == (B, H, W, cout)
    assert jnp.allclose(y, ref, atol=1e-3, rtol=1e-3), float(
        jnp.max(jnp.abs(y - ref)))

    # --- larger shape: exercises the two-pass streaming path ----------------
    x2 = jax.random.normal(kx2, (4, 64, 64, cin), dtype=jnp.float32)
    y2 = jax.block_until_ready(fcn(x2, w, b, gamma, beta))
    ref2 = reference(x2, w, b, gamma, beta)
    assert y2.shape == (4, 64, 64, cout)
    assert jnp.allclose(y2, ref2, atol=1e-3, rtol=1e-3), float(
        jnp.max(jnp.abs(y2 - ref2)))

    print("KERNEL_OK")
</pallas_src>

<mosaic_0001>
module attributes {stable_mosaic.version = 11 : i64} {
  func.func @_fused_kernel(%arg0: memref<128x16xf32, #tpu.memory_space<vmem>>, %arg1: memref<16x128xf32, #tpu.memory_space<vmem>>, %arg2: memref<1x128xf32, #tpu.memory_space<vmem>>, %arg3: memref<1x128xf32, #tpu.memory_space<vmem>>, %arg4: memref<1x128xf32, #tpu.memory_space<vmem>>, %arg5: memref<128x128xf32, #tpu.memory_space<vmem>>, %arg6: memref<128x128xf32, #tpu.memory_space<vmem>>) attributes {dimension_semantics = [], scalar_prefetch = 0 : i64, scratch_operands = 0 : i64, tpu.core_type = #tpu.core_type<tc>} {
    %c0 = arith.constant 0 : index
    %c0_0 = arith.constant 0 : index
    %0 = vector.load %arg0[%c0, %c0_0] : memref<128x16xf32, #tpu.memory_space<vmem>>, vector<128x16xf32>
    %c0_1 = arith.constant 0 : index
    %c0_2 = arith.constant 0 : index
    %1 = vector.load %arg1[%c0_1, %c0_2] : memref<16x128xf32, #tpu.memory_space<vmem>>, vector<16x128xf32>
    %cst = arith.constant dense<0.000000e+00> : vector<128x128xf32>
    %2 = tpu.matmul %0, %1, %cst {dimension_numbers = #tpu.dot_dimension_numbers<[1], [0], [0], [1], [0, 0, 1, 1], [], []>} : vector<128x16xf32>, vector<16x128xf32>, vector<128x128xf32> -> vector<128x128xf32>
    %c0_3 = arith.constant 0 : index
    %c0_4 = arith.constant 0 : index
    %3 = vector.load %arg2[%c0_3, %c0_4] : memref<1x128xf32, #tpu.memory_space<vmem>>, vector<1x128xf32>
    %4 = vector.broadcast %3 : vector<1x128xf32> to vector<128x128xf32>
    %5 = arith.addf %2, %4 : vector<128x128xf32>
    %cst_5 = arith.constant 0.000000e+00 : f32
    %6 = vector.broadcast %cst_5 : f32 to vector<128x128xf32>
    %7 = arith.maximumf %5, %6 : vector<128x128xf32>
    %cst_6 = arith.constant dense<0.000000e+00> : vector<128xf32>
    %8 = vector.multi_reduction <add>, %7, %cst_6 [0] : vector<128x128xf32> to vector<128xf32>
    %9 = vector.shape_cast %8 : vector<128xf32> to vector<1x128xf32>
    %c0_7 = arith.constant 0 : index
    %c0_8 = arith.constant 0 : index
    %10 = vector.load %arg5[%c0_7, %c0_8] : memref<128x128xf32, #tpu.memory_space<vmem>>, vector<128x128xf32>
    %cst_9 = arith.constant dense<0.000000e+00> : vector<1x128xf32>
    %11 = tpu.matmul %9, %10, %cst_9 {dimension_numbers = #tpu.dot_dimension_numbers<[1], [0], [0], [1], [0, 0, 1, 1], [], []>} : vector<1x128xf32>, vector<128x128xf32>, vector<1x128xf32> -> vector<1x128xf32>
    %cst_10 = arith.constant 0.001953125 : f32
    %12 = vector.broadcast %cst_10 : f32 to vector<1x128xf32>
    %13 = arith.mulf %11, %12 : vector<1x128xf32>
    %14 = vector.broadcast %13 : vector<1x128xf32> to vector<128x128xf32>
    %15 = arith.subf %7, %14 : vector<128x128xf32>
    %16 = arith.mulf %15, %15 : vector<128x128xf32>
    %cst_11 = arith.constant dense<0.000000e+00> : vector<128xf32>
    %17 = vector.multi_reduction <add>, %16, %cst_11 [0] : vector<128x128xf32> to vector<128xf32>
    %18 = vector.shape_cast %17 : vector<128xf32> to vector<1x128xf32>
    %c0_12 = arith.constant 0 : index
    %c0_13 = arith.constant 0 : index
    %19 = vector.load %arg5[%c0_12, %c0_13] : memref<128x128xf32, #tpu.memory_space<vmem>>, vector<128x128xf32>
    %cst_14 = arith.constant dense<0.000000e+00> : vector<1x128xf32>
    %20 = tpu.matmul %18, %19, %cst_14 {dimension_numbers = #tpu.dot_dimension_numbers<[1], [0], [0], [1], [0, 0, 1, 1], [], []>} : vector<1x128xf32>, vector<128x128xf32>, vector<1x128xf32> -> vector<1x128xf32>
    %cst_15 = arith.constant 0.001953125 : f32
    %21 = vector.broadcast %cst_15 : f32 to vector<1x128xf32>
    %22 = arith.mulf %20, %21 : vector<1x128xf32>
    %cst_16 = arith.constant 9.99999974E-6 : f32
    %23 = vector.broadcast %cst_16 : f32 to vector<1x128xf32>
    %24 = arith.addf %22, %23 : vector<1x128xf32>
    %25 = math.rsqrt %24 : vector<1x128xf32>
    %c0_17 = arith.constant 0 : index
    %c0_18 = arith.constant 0 : index
    %26 = vector.load %arg3[%c0_17, %c0_18] : memref<1x128xf32, #tpu.memory_space<vmem>>, vector<1x128xf32>
    %27 = arith.mulf %26, %25 : vector<1x128xf32>
    %c0_19 = arith.constant 0 : index
    %c0_20 = arith.constant 0 : index
    %28 = vector.load %arg4[%c0_19, %c0_20] : memref<1x128xf32, #tpu.memory_space<vmem>>, vector<1x128xf32>
    %29 = arith.mulf %13, %27 : vector<1x128xf32>
    %30 = arith.subf %28, %29 : vector<1x128xf32>
    %31 = vector.broadcast %27 : vector<1x128xf32> to vector<128x128xf32>
    %32 = arith.mulf %7, %31 : vector<128x128xf32>
    %33 = vector.broadcast %30 : vector<1x128xf32> to vector<128x128xf32>
    %34 = arith.addf %32, %33 : vector<128x128xf32>
    %c0_21 = arith.constant 0 : index
    %c0_22 = arith.constant 0 : index
    %35 = vector.load %arg6[%c0_21, %c0_22] : memref<128x128xf32, #tpu.memory_space<vmem>>, vector<128x128xf32>
    tpu.vector_store %arg6[%c0_21, %c0_22], %34 {strides = array<i32>} : memref<128x128xf32, #tpu.memory_space<vmem>>, vector<128x128xf32>,
    return
  }
}

</mosaic_0001>

<llo_original>
// kernel: tile.18
$region0: #{tile.18}
  #allocation0 [shape = 's32[1]{0}', space=sflag, size = 0x4, scoped, tag = 'scoped memory for tile.18']
  %s0 = inlined_call_operand.vmem [shape: f32[32], index: 0, kind: input, shape index: {}]
  %s1 = inlined_call_operand.vmem [shape: f32[4,32], index: 1, kind: output, shape index: {}]
  // Predicated region
  $region2: #{tile.18} parent=0 // pred_check
    _
  $region3: #{tile.18} parent=0 // pred_check_branch
    %3 = sbr.rel (0) target = $region5
  $region4: #{tile.18} parent=0 // pred_region
    _
  $region5: #{tile.18} parent=0 // pred_fallthru
    _
  %v4 = vld [vmem:[%s0] ss:$0 sm:$0xff]
  %5 = vst [vmem:[%s1] sm:$0xf] %v4

// kernel: tile.19
$region0: #{tile.19}
  %s0 = inlined_call_operand.vmem [shape: f32[4,32], index: 0, kind: input, shape index: {}]
  %s1 = inlined_call_operand.vmem [shape: f32[1,128], index: 1, kind: output, shape index: {}]
  $region1: #{tile.19} parent=0
    #allocation0 [shape = 'u8[4096]{0}', space=vmem, size = 0x1000, scoped, tag = 'scoped mem for output reshape']
    #allocation1 [shape = 'u8[4096]{0}', space=vmem, size = 0x1000, scoped, tag = 'scoped mem for input reshape']
    %s3 = ssub.s32 16, 1
    %v4 = vld [vmem:[%s0] sm:%s3]
    %5 = vst [vmem:[#allocation1] sm:%s3] %v4
    %v6 = vld [vmem:[#allocation1] sm:$0x1]
    %vm7 = vcmask 261120
    %8 = vst.msk [vmem:[#allocation0] sm:$0x1] %vm7, %v6
    %s9 = scalar_lea.vmem [#allocation1], 3
    %v10 = vld [vmem:[%s9] sm:$0x1]
    %11 = vrot.lane.b32.xlu0 %v10, 96
    %v12 = vpop.permute.xlu0 %11
    %vm13 = vcmask 1048320
    %14 = vst.msk [vmem:[#allocation0] sm:$0x1] %vm13, %v12
    %s15 = scalar_lea.vmem [#allocation1], 2
    %v16 = vld [vmem:[%s15] sm:$0x1]
    %17 = vrot.lane.b32.xlu0 %v16, 64
    %v18 = vpop.permute.xlu0 %17
    %vm19 = vcmask 785920
    %20 = vst.msk [vmem:[#allocation0] sm:$0x1] %vm19, %v18
    %s21 = scalar_lea.vmem [#allocation1], 1
    %v22 = vld [vmem:[%s21] sm:$0x1]
    %23 = vrot.lane.b32.xlu0 %v22, 32
    %v24 = vpop.permute.xlu0 %23
    %vm25 = vcmask 523520
    %26 = vst.msk [vmem:[#allocation0] sm:$0x1] %vm25, %v24
    %s28 = ssub.s32 2, 1
    %v29 = vld [vmem:[#allocation0] sm:%s28]
    %s31 = ssub.s32 2, 1
    %32 = vst [vmem:[%s1] sm:%s31] %v29

// kernel: fcn_forward.1
$region0: #{fcn_forward.1}
  #allocation0 [shape = 'u32[]', space=smem, size = 0x4, offset = 0x4, fixed_abs, tag = 'smem constant byte address 0x4 - core index']
  #allocation1 [shape = 'u32[72,128]{1,0:T(1,128)}', space=vmem, size = 0x9000, scoped, tag = 'internal scratch']
  %s0 = inlined_call_operand.vmem [shape: f32[128,16], index: 0, kind: input, shape index: {}]
  %s1 = inlined_call_operand.vmem [shape: f32[16,128], index: 1, kind: input, shape index: {}]
  %s2 = inlined_call_operand.vmem [shape: f32[1,128], index: 2, kind: input, shape index: {}]
  %s3 = inlined_call_operand.vmem [shape: f32[1,128], index: 3, kind: input, shape index: {}]
  %s4 = inlined_call_operand.vmem [shape: f32[1,128], index: 4, kind: input, shape index: {}]
  %s5 = inlined_call_operand.vmem [shape: f32[128,128], index: 5, kind: input, shape index: {}]
  %s6 = inlined_call_operand.vmem [shape: f32[128,128], index: 6, kind: output, shape index: {}]
  %s7 = sld [smem:[#allocation0]]
  $region34: #{fcn_forward.1} parent=0
    _
  %s9 = ssub.s32 1, %s7
  %s10 = scalar_select 0, %s9, %s7
  // Predicated region
  $region2: #{fcn_forward.1} parent=0 // pred_check
    _
  $region3: #{fcn_forward.1} parent=0 // pred_check_branch
    %12 = sbr.rel (0) target = $region5
  $region4: #{fcn_forward.1} parent=0 // pred_region
    _
  $region5: #{fcn_forward.1} parent=0 // pred_fallthru
    _
  // Predicated region
  $region6: #{fcn_forward.1} parent=0 // pred_check
    _
  $region7: #{fcn_forward.1} parent=0 // pred_check_branch
    %14 = sbr.rel (0) target = $region9
  $region8: #{fcn_forward.1} parent=0 // pred_region
    _
  $region9: #{fcn_forward.1} parent=0 // pred_fallthru
    _
  // Predicated region
  $region10: #{fcn_forward.1} parent=0 // pred_check
    _
  $region11: #{fcn_forward.1} parent=0 // pred_check_branch
    %16 = sbr.rel (0) target = $region13
  $region12: #{fcn_forward.1} parent=0 // pred_region
    _
  $region13: #{fcn_forward.1} parent=0 // pred_fallthru
    _
  // Predicated region
  $region14: #{fcn_forward.1} parent=0 // pred_check
    _
  $region15: #{fcn_forward.1} parent=0 // pred_check_branch
    %18 = sbr.rel (0) target = $region17
  $region16: #{fcn_forward.1} parent=0 // pred_region
    _
  $region17: #{fcn_forward.1} parent=0 // pred_fallthru
    _
  // Predicated region
  $region18: #{fcn_forward.1} parent=0 // pred_check
    _
  $region19: #{fcn_forward.1} parent=0 // pred_check_branch
    %20 = sbr.rel (0) target = $region21
  $region20: #{fcn_forward.1} parent=0 // pred_region
    _
  $region21: #{fcn_forward.1} parent=0 // pred_fallthru
    _
  // Predicated region
  $region22: #{fcn_forward.1} parent=0 // pred_check
    _
  $region23: #{fcn_forward.1} parent=0 // pred_check_branch
    %22 = sbr.rel (0) target = $region25
  $region24: #{fcn_forward.1} parent=0 // pred_region
    _
  $region25: #{fcn_forward.1} parent=0 // pred_fallthru
    _
  %v23 = vld [vmem:[%s0] sm:$0xff]
  %v24 = vld [vmem:[%s0 + $0x8] sm:$0xff]
  %v25 = vld [vmem:[%s0 + $0x10] sm:$0xff]
  %v26 = vld [vmem:[%s0 + $0x18] sm:$0xff]
  %v27 = vld [vmem:[%s0 + $0x20] sm:$0xff]
  %v28 = vld [vmem:[%s0 + $0x28] sm:$0xff]
  %v29 = vld [vmem:[%s0 + $0x30] sm:$0xff]
  %v30 = vld [vmem:[%s0 + $0x38] sm:$0xff]
  %v31 = vld [vmem:[%s0 + $0x40] sm:$0xff]
  %v32 = vld [vmem:[%s0 + $0x48] sm:$0xff]
  %v33 = vld [vmem:[%s0 + $0x50] sm:$0xff]
  %v34 = vld [vmem:[%s0 + $0x58] sm:$0xff]
  %v35 = vld [vmem:[%s0 + $0x60] sm:$0xff]
  %v36 = vld [vmem:[%s0 + $0x68] sm:$0xff]
  %v37 = vld [vmem:[%s0 + $0x70] sm:$0xff]
  %v38 = vld [vmem:[%s0 + $0x78] sm:$0xff]
  %v39 = vld [vmem:[%s1] sm:$0xff]
  %v40 = vld [vmem:[%s1 + $0x8] sm:$0xff]
  %v41 = vld [vmem:[%s2] sm:$0x1]
  %v43 = vperm.slane %v41, 0
  %vm45 = vcmask 130048
  %v47 = vsel %vm45, %v23, 0
  %v50 = vsel %vm45, %v24, 0
  %v53 = vsel %vm45, %v25, 0
  %v56 = vsel %vm45, %v26, 0
  %v59 = vsel %vm45, %v27, 0
  %v62 = vsel %vm45, %v28, 0
  %v65 = vsel %vm45, %v29, 0
  %v68 = vsel %vm45, %v30, 0
  %v71 = vsel %vm45, %v31, 0
  %v74 = vsel %vm45, %v32, 0
  %v77 = vsel %vm45, %v33, 0
  %v80 = vsel %vm45, %v34, 0
  %v83 = vsel %vm45, %v35, 0
  %v86 = vsel %vm45, %v36, 0
  %v89 = vsel %vm45, %v37, 0
  %v92 = vsel %vm45, %v38, 0
  %94 = vmatpush.msra.mxu0 0.0
  %95 = vmatpush.msra.mxu0 0.0
  %96 = vmatpush.msra.mxu0 0.0
  %97 = vmatpush.msra.mxu0 0.0
  %98 = vmatpush.msra.mxu0 0.0
  %99 = vmatpush.msra.mxu0 0.0
  %100 = vmatpush.msra.mxu0 0.0
  %101 = vmatpush.msra.mxu0 0.0
  %102 = vmatpush.msra.mxu0 0.0
  %103 = vmatpush.msra.mxu0 0.0
  %104 = vmatpush.msra.mxu0 0.0
  %105 = vmatpush.msra.mxu0 0.0
  %106 = vmatpush.msra.mxu0 0.0
  %107 = vmatpush.msra.mxu0 0.0
  %108 = vmatpush.msra.mxu0 %v40
  %109 = vmatpush.msra.mxu0 %v39
  %110 = vmatmul.f32.gmra.mxu0 %v47
  %v111 = vpop.f32.mrf.mxu0
  %v112 = vadd.f32 %v43, %v111
  %113 = vmatmul.f32.gmra.mxu0 %v50
  %v114 = vpop.f32.mrf.mxu0
  %v115 = vadd.f32 %v43, %v114
  %116 = vmatmul.f32.gmra.mxu0 %v53
  %v117 = vpop.f32.mrf.mxu0
  %v118 = vadd.f32 %v43, %v117
  %119 = vmatmul.f32.gmra.mxu0 %v56
  %v120 = vpop.f32.mrf.mxu0
  %v121 = vadd.f32 %v43, %v120
  %122 = vmatmul.f32.gmra.mxu0 %v59
  %v123 = vpop.f32.mrf.mxu0
  %v124 = vadd.f32 %v43, %v123
  %125 = vmatmul.f32.gmra.mxu0 %v62
  %v126 = vpop.f32.mrf.mxu0
  %v127 = vadd.f32 %v43, %v126
  %128 = vmatmul.f32.gmra.mxu0 %v65
  %v129 = vpop.f32.mrf.mxu0
  %v130 = vadd.f32 %v43, %v129
  %131 = vmatmul.f32.gmra.mxu0 %v68
  %v132 = vpop.f32.mrf.mxu0
  %v133 = vadd.f32 %v43, %v132
  %134 = vmatmul.f32.gmra.mxu0 %v71
  %v135 = vpop.f32.mrf.mxu0
  %v136 = vadd.f32 %v43, %v135
  %137 = vmatmul.f32.gmra.mxu0 %v74
  %v138 = vpop.f32.mrf.mxu0
  %v139 = vadd.f32 %v43, %v138
  %140 = vmatmul.f32.gmra.mxu0 %v77
  %v141 = vpop.f32.mrf.mxu0
  %v142 = vadd.f32 %v43, %v141
  %143 = vmatmul.f32.gmra.mxu0 %v80
  %v144 = vpop.f32.mrf.mxu0
  %v145 = vadd.f32 %v43, %v144
  %146 = vmatmul.f32.gmra.mxu0 %v83
  %v147 = vpop.f32.mrf.mxu0
  %v148 = vadd.f32 %v43, %v147
  %149 = vmatmul.f32.gmra.mxu0 %v86
  %v150 = vpop.f32.mrf.mxu0
  %v151 = vadd.f32 %v43, %v150
  %152 = vmatmul.f32.gmra.mxu0 %v89
  %v153 = vpop.f32.mrf.mxu0
  %v154 = vadd.f32 %v43, %v153
  %155 = vmatmul.f32.gmra.mxu0 %v92
  %v156 = vpop.f32.mrf.mxu0
  %v157 = vadd.f32 %v43, %v156
  %158 = vdwg.mxu0
  %v159 = vmax.f32 %v112, 0.0
  %v160 = vmax.f32 %v115, 0.0
  %v161 = vmax.f32 %v118, 0.0
  %v162 = vmax.f32 %v121, 0.0
  %v163 = vmax.f32 %v124, 0.0
  %v164 = vmax.f32 %v127, 0.0
  %v165 = vmax.f32 %v130, 0.0
  %v166 = vmax.f32 %v133, 0.0
  %v167 = vmax.f32 %v136, 0.0
  %v168 = vmax.f32 %v139, 0.0
  %v169 = vmax.f32 %v142, 0.0
  %v170 = vmax.f32 %v145, 0.0
  %v171 = vmax.f32 %v148, 0.0
  %v172 = vmax.f32 %v151, 0.0
  %v173 = vmax.f32 %v154, 0.0
  %v174 = vmax.f32 %v157, 0.0
  %v175 = vadd.f32 %v159, %v160
  %v176 = vadd.f32 %v175, %v161
  %v177 = vadd.f32 %v176, %v162
  %v178 = vadd.f32 %v177, %v163
  %v179 = vadd.f32 %v178, %v164
  %v180 = vadd.f32 %v179, %v165
  %v181 = vadd.f32 %v180, %v166
  %v182 = vadd.f32 %v181, %v167
  %v183 = vadd.f32 %v182, %v168
  %v184 = vadd.f32 %v183, %v169
  %v185 = vadd.f32 %v184, %v170
  %v186 = vadd.f32 %v185, %v171
  %v187 = vadd.f32 %v186, %v172
  %v188 = vadd.f32 %v187, %v173
  %v189 = vadd.f32 %v188, %v174
  %v190 = vrot.slane %v189, 4
  %v191 = vadd.f32 %v189, %v190
  %v192 = vrot.slane %v191, 2
  %v193 = vadd.f32 %v191, %v192
  %v194 = vrot.slane %v193, 1
  %v195 = vadd.f32 %v193, %v194
  %v196 = vld [vmem:[%s5] sm:$0xff]
  %v197 = vld [vmem:[%s5 + $0x8] sm:$0xff]
  %v198 = vld [vmem:[%s5 + $0x10] sm:$0xff]
  %v199 = vld [vmem:[%s5 + $0x18] sm:$0xff]
  %v200 = vld [vmem:[%s5 + $0x20] sm:$0xff]
  %v201 = vld [vmem:[%s5 + $0x28] sm:$0xff]
  %v202 = vld [vmem:[%s5 + $0x30] sm:$0xff]
  %v203 = vld [vmem:[%s5 + $0x38] sm:$0xff]
  %v204 = vld [vmem:[%s5 + $0x40] sm:$0xff]
  %v205 = vld [vmem:[%s5 + $0x48] sm:$0xff]
  %v206 = vld [vmem:[%s5 + $0x50] sm:$0xff]
  %v207 = vld [vmem:[%s5 + $0x58] sm:$0xff]
  %v208 = vld [vmem:[%s5 + $0x60] sm:$0xff]
  %v209 = vld [vmem:[%s5 + $0x68] sm:$0xff]
  %v210 = vld [vmem:[%s5 + $0x70] sm:$0xff]
  %v211 = vld [vmem:[%s5 + $0x78] sm:$0xff]
  %212 = vmatpush.msra.mxu0 %v211
  %213 = vmatpush.msra.mxu0 %v210
  %214 = vmatpush.msra.mxu0 %v209
  %215 = vmatpush.msra.mxu0 %v208
  %216 = vmatpush.msra.mxu0 %v207
  %217 = vmatpush.msra.mxu0 %v206
  %218 = vmatpush.msra.mxu0 %v205
  %219 = vmatpush.msra.mxu0 %v204
  %220 = vmatpush.msra.mxu0 %v203
  %221 = vmatpush.msra.mxu0 %v202
  %222 = vmatpush.msra.mxu0 %v201
  %223 = vmatpush.msra.mxu0 %v200
  %224 = vmatpush.msra.mxu0 %v199
  %225 = vmatpush.msra.mxu0 %v198
  %226 = vmatpush.msra.mxu0 %v197
  %227 = vmatpush.msra.mxu0 %v196
  %228 = vmatmul.f32.gmra.mxu0 %v195
  %v229 = vpop.f32.mrf.mxu0
  %v230 = vadd.f32 0.0, %v229
  %231 = vdwg.mxu0
  %v232 = vmul.f32 %v230, 0.001953125
  %v233 = vperm.slane %v232, 0
  %v234 = vsub.f32 %v159, %v233
  %v235 = vsub.f32 %v160, %v233
  %v236 = vsub.f32 %v161, %v233
  %v237 = vsub.f32 %v162, %v233
  %v238 = vsub.f32 %v163, %v233
  %v239 = vsub.f32 %v164, %v233
  %v240 = vsub.f32 %v165, %v233
  %v241 = vsub.f32 %v166, %v233
  %v242 = vsub.f32 %v167, %v233
  %v243 = vsub.f32 %v168, %v233
  %v244 = vsub.f32 %v169, %v233
  %v245 = vsub.f32 %v170, %v233
  %v246 = vsub.f32 %v171, %v233
  %v247 = vsub.f32 %v172, %v233
  %v248 = vsub.f32 %v173, %v233
  %v249 = vsub.f32 %v174, %v233
  %v250 = vmul.f32 %v234, %v234
  %v251 = vmul.f32 %v235, %v235
  %v252 = vmul.f32 %v236, %v236
  %v253 = vmul.f32 %v237, %v237
  %v254 = vmul.f32 %v238, %v238
  %v255 = vmul.f32 %v239, %v239
  %v256 = vmul.f32 %v240, %v240
  %v257 = vmul.f32 %v241, %v241
  %v258 = vmul.f32 %v242, %v242
  %v259 = vmul.f32 %v243, %v243
  %v260 = vmul.f32 %v244, %v244
  %v261 = vmul.f32 %v245, %v245
  %v262 = vmul.f32 %v246, %v246
  %v263 = vmul.f32 %v247, %v247
  %v264 = vmul.f32 %v248, %v248
  %v265 = vmul.f32 %v249, %v249
  %v266 = vadd.f32 %v250, %v251
  %v267 = vadd.f32 %v266, %v252
  %v268 = vadd.f32 %v267, %v253
  %v269 = vadd.f32 %v268, %v254
  %v270 = vadd.f32 %v269, %v255
  %v271 = vadd.f32 %v270, %v256
  %v272 = vadd.f32 %v271, %v257
  %v273 = vadd.f32 %v272, %v258
  %v274 = vadd.f32 %v273, %v259
  %v275 = vadd.f32 %v274, %v260
  %v276 = vadd.f32 %v275, %v261
  %v277 = vadd.f32 %v276, %v262
  %v278 = vadd.f32 %v277, %v263
  %v279 = vadd.f32 %v278, %v264
  %v280 = vadd.f32 %v279, %v265
  %v281 = vrot.slane %v280, 4
  %v282 = vadd.f32 %v280, %v281
  %v283 = vrot.slane %v282, 2
  %v284 = vadd.f32 %v282, %v283
  %v285 = vrot.slane %v284, 1
  %v286 = vadd.f32 %v284, %v285
  %287 = vmatpush.msra.mxu0 %v211
  %288 = vmatpush.msra.mxu0 %v210
  %289 = vmatpush.msra.mxu0 %v209
  %290 = vmatpush.msra.mxu0 %v208
  %291 = vmatpush.msra.mxu0 %v207
  %292 = vmatpush.msra.mxu0 %v206
  %293 = vmatpush.msra.mxu0 %v205
  %294 = vmatpush.msra.mxu0 %v204
  %295 = vmatpush.msra.mxu0 %v203
  %296 = vmatpush.msra.mxu0 %v202
  %297 = vmatpush.msra.mxu0 %v201
  %298 = vmatpush.msra.mxu0 %v200
  %299 = vmatpush.msra.mxu0 %v199
  %300 = vmatpush.msra.mxu0 %v198
  %301 = vmatpush.msra.mxu0 %v197
  %302 = vmatpush.msra.mxu0 %v196
  %303 = vmatmul.f32.gmra.mxu0 %v286
  %v304 = vpop.f32.mrf.mxu0
  %v305 = vadd.f32 0.0, %v304
  %306 = vdwg.mxu0
  %v307 = vmul.f32 %v305, 0.001953125
  %v308 = vadd.f32 %v307, 1e-05
  %v309 = vrsqrt.pop %v308
  %v310 = vmul.f32 %v309, %v308
  %v311 = vmul.f32 %v310, %v309
  %v312 = vmul.f32 0.5, %v311
  %v313 = vsub.f32 1.5, %v312
  %v314 = vmul.f32 %v309, %v313
  %vm315 = vweird.f32 %v308
  %vm316 = vweird.f32 %v309
  %vm317 = vmor %vm315, %vm316
  %v318 = vsel %vm317, %v309, %v314
  %v319 = vld [vmem:[%s3] sm:$0x1]
  %v320 = vmul.f32 %v319, %v318
  %v321 = vld [vmem:[%s4] sm:$0x1]
  %v322 = vmul.f32 %v232, %v320
  %v323 = vsub.f32 %v321, %v322
  %v325 = vperm.slane %v320, 0
  %v327 = vmul.f32 %v159, %v325
  %v328 = vmul.f32 %v160, %v325
  %v329 = vmul.f32 %v161, %v325
  %v330 = vmul.f32 %v162, %v325
  %v331 = vmul.f32 %v163, %v325
  %v332 = vmul.f32 %v164, %v325
  %v333 = vmul.f32 %v165, %v325
  %v334 = vmul.f32 %v166, %v325
  %v335 = vmul.f32 %v167, %v325
  %v336 = vmul.f32 %v168, %v325
  %v337 = vmul.f32 %v169, %v325
  %v338 = vmul.f32 %v170, %v325
  %v339 = vmul.f32 %v171, %v325
  %v340 = vmul.f32 %v172, %v325
  %v341 = vmul.f32 %v173, %v325
  %v342 = vmul.f32 %v174, %v325
  %v344 = vperm.slane %v323, 0
  %v346 = vadd.f32 %v327, %v344
  %v347 = vadd.f32 %v328, %v344
  %v348 = vadd.f32 %v329, %v344
  %v349 = vadd.f32 %v330, %v344
  %v350 = vadd.f32 %v331, %v344
  %v351 = vadd.f32 %v332, %v344
  %v352 = vadd.f32 %v333, %v344
  %v353 = vadd.f32 %v334, %v344
  %v354 = vadd.f32 %v335, %v344
  %v355 = vadd.f32 %v336, %v344
  %v356 = vadd.f32 %v337, %v344
  %v357 = vadd.f32 %v338, %v344
  %v358 = vadd.f32 %v339, %v344
  %v359 = vadd.f32 %v340, %v344
  %v360 = vadd.f32 %v341, %v344
  %v361 = vadd.f32 %v342, %v344
  %362 = vst [vmem:[%s6] sm:$0xff] %v346
  %363 = vst [vmem:[%s6 + $0x8] sm:$0xff] %v347
  %364 = vst [vmem:[%s6 + $0x10] sm:$0xff] %v348
  %365 = vst [vmem:[%s6 + $0x18] sm:$0xff] %v349
  %366 = vst [vmem:[%s6 + $0x20] sm:$0xff] %v350
  %367 = vst [vmem:[%s6 + $0x28] sm:$0xff] %v351
  %368 = vst [vmem:[%s6 + $0x30] sm:$0xff] %v352
  %369 = vst [vmem:[%s6 + $0x38] sm:$0xff] %v353
  %370 = vst [vmem:[%s6 + $0x40] sm:$0xff] %v354
  %371 = vst [vmem:[%s6 + $0x48] sm:$0xff] %v355
  %372 = vst [vmem:[%s6 + $0x50] sm:$0xff] %v356
  %373 = vst [vmem:[%s6 + $0x58] sm:$0xff] %v357
  %374 = vst [vmem:[%s6 + $0x60] sm:$0xff] %v358
  %375 = vst [vmem:[%s6 + $0x68] sm:$0xff] %v359
  %376 = vst [vmem:[%s6 + $0x70] sm:$0xff] %v360
  %377 = vst [vmem:[%s6 + $0x78] sm:$0xff] %v361
  // Predicated region
  $region26: #{fcn_forward.1} parent=0 // pred_check
    _
  $region27: #{fcn_forward.1} parent=0 // pred_check_branch
    %379 = sbr.rel (0) target = $region29
  $region28: #{fcn_forward.1} parent=0 // pred_region
    _
  $region29: #{fcn_forward.1} parent=0 // pred_fallthru
    _
  // Predicated region
  $region30: #{fcn_forward.1} parent=0 // pred_check
    _
  $region31: #{fcn_forward.1} parent=0 // pred_check_branch
    %381 = sbr.rel (0) target = $region33
  $region32: #{fcn_forward.1} parent=0 // pred_region
    _
  $region33: #{fcn_forward.1} parent=0 // pred_fallthru
    _

</llo_original>
